<compile_context>
chip_gen: v5e
topology: v5e:2x2
jax: 0.10.0
libtpu: 0.0.40
codegen_flags: <defaults>
</compile_context>

<pallas_src>
import math
import functools

import jax
import jax.numpy as jnp
from jax.experimental import pallas as pl
from jax.experimental.pallas import tpu as pltpu


def _make_pe_table(d_model: int, max_len: int = 75) -> jnp.ndarray:
    """Deterministic sinusoidal PE table, identical to the PyTorch __init__."""
    position = jnp.arange(0, max_len, dtype=jnp.float32)[:, None]          # (L, 1)
    div_term = jnp.exp(
        jnp.arange(0, d_model, 2, dtype=jnp.float32)
        * -(math.log(10000.0) / d_model)
    )                                                                       # (D/2,)
    pe = jnp.zeros((max_len, d_model), dtype=jnp.float32)
    pe = pe.at[:, 0::2].set(jnp.sin(position * div_term))
    pe = pe.at[:, 1::2].set(jnp.cos(position * div_term))
    return pe                                                               # (L, D)


def _pos_enc_kernel(x_ref, pe_ref, o_ref):
    # x_ref / o_ref: (bt, rt) block; pe_ref: (1, rt) broadcast over sublanes.
    o_ref[...] = (x_ref[...].astype(jnp.float32) + pe_ref[...]).astype(o_ref.dtype)


def _pos_enc_dropout_kernel(x_ref, pe_ref, bits_ref, o_ref, *, threshold, scale):
    # Training-mode variant: (x + pe) * bernoulli_mask / (1 - rate).
    # One unsigned 32-bit compare, scale folded into the select.
    y = x_ref[...].astype(jnp.float32) + pe_ref[...]
    keep = bits_ref[...] < jnp.uint32(threshold)
    o_ref[...] = (y * jnp.where(keep, jnp.float32(scale), jnp.float32(0.0))
                  ).astype(o_ref.dtype)


# ~2 MiB per block buffer: with default double-buffering of x/out(/bits) this stays
# well under v5e's 16 MiB scoped-VMEM default and v7x's 64 MiB physical VMEM, while
# still sitting on the HBM-roofline plateau for a streaming elementwise kernel.
_TARGET_BLOCK_BYTES = 2 * 1024 * 1024


def _choose_tiles(B: int, row: int, itemsize: int):
    """Pick (batch-row tile, lane tile) for a (B, row) slab."""
    # Lane-axis tile: full row when an 8-row slab fits the budget; otherwise a
    # multiple of 128 so stores stay wide/unmasked (lane-dense).
    if 8 * row * itemsize > _TARGET_BLOCK_BYTES and row % 128 == 0:
        rt = max(128, (_TARGET_BLOCK_BYTES // (8 * itemsize)) // 128 * 128)
        rt = min(rt, row)
    else:
        rt = row
        # TODO(synk): rows larger than the VMEM budget whose length is not a
        #             multiple of 128 are not lane-tiled; pad S*D upstream if needed.

    rows_fit = max(1, _TARGET_BLOCK_BYTES // (rt * itemsize))
    if rows_fit >= B:
        bt = B
        # v7x megacore: a single grid block leaves the second TensorCore idle;
        # split a big-enough batch into >= 2 multiple-of-8 row blocks.
        if rt == row and B >= 16:
            bt = (((B + 1) // 2) + 7) // 8 * 8
    else:
        bt = max(8, (rows_fit // 8) * 8)
    return bt, rt


def positional_encoding_forward(x, pe_table, *, training=False,
                                dropout_rate=0.1, rng_key=None):
    """x: (B, S, D). pe_table: (max_len, D). Returns (B, S, D), same dtype as x."""
    B, S, D = x.shape
    row = S * D
    itemsize = jnp.dtype(x.dtype).itemsize

    x2 = x.reshape(B, row)                                                  # (B, S*D)
    pe2 = pe_table[:S, :].reshape(1, row).astype(jnp.float32)               # (1, S*D)

    bt, rt = _choose_tiles(B, row, itemsize)
    nb, nl = pl.cdiv(B, bt), pl.cdiv(row, rt)

    x_spec = pl.BlockSpec((bt, rt), lambda i, j: (i, j))
    pe_spec = pl.BlockSpec((1, rt), lambda i, j: (0, j))
    out_spec = pl.BlockSpec((bt, rt), lambda i, j: (i, j))
    out_shape = jax.ShapeDtypeStruct((B, row), x.dtype)
    cparams = pltpu.CompilerParams(
        dimension_semantics=("parallel", "parallel"))

    if (not training) or dropout_rate <= 0.0:
        # Eval mode: nn.Dropout is the identity, so the kernel is just x + pe.
        cost = pl.CostEstimate(flops=B * row, transcendentals=0,
                               bytes_accessed=2 * B * row * itemsize + 4 * row)
        out2 = pl.pallas_call(
            _pos_enc_kernel,
            out_shape=out_shape,
            grid_spec=pltpu.PrefetchScalarGridSpec(
                num_scalar_prefetch=0,
                grid=(nb, nl),
                in_specs=[x_spec, pe_spec],
                out_specs=out_spec,
            ),
            compiler_params=cparams,
            cost_estimate=cost,
        )(x2, pe2)
        return out2.reshape(B, S, D)

    # Training mode: dropout mask from uint32 bits streamed in as an operand.
    # TODO(synk): mask bit pattern differs from torch's dropout RNG (same
    #             distribution, different stream); on real TPUs the in-kernel HW
    #             PRNG could avoid streaming B*row*4 extra mask bytes from HBM.
    if rng_key is None:
        rng_key = jax.random.PRNGKey(0)
    bits = jax.random.bits(rng_key, (B, row), dtype=jnp.uint32)
    keep_prob = 1.0 - float(dropout_rate)
    threshold = min(int(round(keep_prob * (1 << 32))), (1 << 32) - 1)
    kernel = functools.partial(_pos_enc_dropout_kernel,
                               threshold=threshold, scale=1.0 / keep_prob)
    bits_spec = pl.BlockSpec((bt, rt), lambda i, j: (i, j))
    cost = pl.CostEstimate(flops=3 * B * row, transcendentals=0,
                           bytes_accessed=2 * B * row * itemsize
                                          + B * row * 4 + 4 * row)
    out2 = pl.pallas_call(
        kernel,
        out_shape=out_shape,
        grid_spec=pltpu.PrefetchScalarGridSpec(
            num_scalar_prefetch=0,
            grid=(nb, nl),
            in_specs=[x_spec, pe_spec, bits_spec],
            out_specs=out_spec,
        ),
        compiler_params=cparams,
        cost_estimate=cost,
    )(x2, pe2, bits)
    return out2.reshape(B, S, D)


if __name__ == "__main__":
    B, S, D = 2, 8, 32
    MAX_LEN = 75

    key = jax.random.PRNGKey(0)
    kx, kdrop = jax.random.split(key)
    x = jax.random.normal(kx, (B, S, D), dtype=jnp.float32)
    pe = _make_pe_table(D, MAX_LEN)
    ref = x + pe[None, :S, :]

    # --- Eval-mode forward (dropout = identity) -----------------------------
    out = positional_encoding_forward(x, pe, training=False)
    out = jax.block_until_ready(out)
    assert out.shape == (B, S, D)
    assert jnp.allclose(out, ref, atol=1e-6), "eval-mode mismatch vs reference"

    # --- Eval-mode forward in bf16 (HBM-traffic path) ------------------------
    out_bf16 = positional_encoding_forward(x.astype(jnp.bfloat16), pe, training=False)
    out_bf16 = jax.block_until_ready(out_bf16)
    assert out_bf16.dtype == jnp.bfloat16
    assert jnp.allclose(out_bf16.astype(jnp.float32), ref, atol=5e-2), \
        "bf16 eval-mode mismatch vs reference"

    # --- Training-mode forward (in-kernel dropout from streamed bits) --------
    rate = 0.1
    out_tr = positional_encoding_forward(x, pe, training=True,
                                         dropout_rate=rate, rng_key=kdrop)
    out_tr = jax.block_until_ready(out_tr)
    assert out_tr.shape == (B, S, D)

    bits_ref = jax.random.bits(kdrop, (B, S * D), dtype=jnp.uint32).reshape(B, S, D)
    thr = jnp.uint32(min(int(round((1.0 - rate) * (1 << 32))), (1 << 32) - 1))
    keep_ref = bits_ref < thr
    ref_tr = jnp.where(keep_ref, ref / (1.0 - rate), 0.0)
    assert jnp.allclose(out_tr, ref_tr, atol=1e-5), "training-mode mismatch"

    print("KERNEL_OK")
</pallas_src>

<mosaic_0001>
module attributes {stable_mosaic.version = 11 : i64} {
  func.func @_pos_enc_kernel(%arg0: i32, %arg1: i32, %arg2: memref<2x256xf32, #tpu.memory_space<vmem>>, %arg3: memref<1x256xf32, #tpu.memory_space<vmem>>, %arg4: memref<2x256xf32, #tpu.memory_space<vmem>>) attributes {dimension_semantics = [#tpu.dimension_semantics<parallel>, #tpu.dimension_semantics<parallel>], iteration_bounds = array<i64: 1, 1>, scalar_prefetch = 0 : i64, scratch_operands = 0 : i64, tpu.core_type = #tpu.core_type<tc>, window_params = [{transform_indices = @transform_0, window_bounds = array<i64: 2, 256>}, {transform_indices = @transform_1, window_bounds = array<i64: 1, 256>}, {transform_indices = @transform_2, window_bounds = array<i64: 2, 256>}]} {
    %c0 = arith.constant 0 : index
    %c0_0 = arith.constant 0 : index
    %0 = vector.load %arg2[%c0, %c0_0] : memref<2x256xf32, #tpu.memory_space<vmem>>, vector<2x256xf32>
    %c0_1 = arith.constant 0 : index
    %c0_2 = arith.constant 0 : index
    %1 = vector.load %arg3[%c0_1, %c0_2] : memref<1x256xf32, #tpu.memory_space<vmem>>, vector<1x256xf32>
    %2 = vector.broadcast %1 : vector<1x256xf32> to vector<2x256xf32>
    %3 = arith.addf %0, %2 : vector<2x256xf32>
    %c0_3 = arith.constant 0 : index
    %c0_4 = arith.constant 0 : index
    %4 = vector.load %arg4[%c0_3, %c0_4] : memref<2x256xf32, #tpu.memory_space<vmem>>, vector<2x256xf32>
    tpu.vector_store %arg4[%c0_3, %c0_4], %3 {strides = array<i32>} : memref<2x256xf32, #tpu.memory_space<vmem>>, vector<2x256xf32>,
    return
  }
  func.func @transform_0(%arg0: i32, %arg1: i32) -> (i32, i32) {
    %c0_i32 = arith.constant 0 : i32
    return %arg0, %arg1 : i32, i32
  }
  func.func @transform_1(%arg0: i32, %arg1: i32) -> (i32, i32) {
    %c0_i32 = arith.constant 0 : i32
    %c0_i32_0 = arith.constant 0 : i32
    return %c0_i32, %arg1 : i32, i32
  }
  func.func @transform_2(%arg0: i32, %arg1: i32) -> (i32, i32) {
    %c0_i32 = arith.constant 0 : i32
    return %arg0, %arg1 : i32, i32
  }
}

</mosaic_0001>

<llo_original>
// kernel: tpu_custom_call.1
$region0: #{tpu_custom_call.1}
  #allocation0 [shape = 'u32[]', space=smem, size = 0x4, offset = 0x4, fixed_abs, tag = 'smem constant byte address 0x4 - core index']
  #allocation1 [shape = 'u32[72,128]{1,0:T(1,128)}', space=vmem, size = 0x9000, scoped, tag = 'internal scratch']
  %s0 = inlined_call_operand.hbm [shape: f32[2,256], index: 0, kind: input, shape index: {}]
  %s1 = inlined_call_operand.hbm [shape: f32[1,256], index: 1, kind: input, shape index: {}]
  %s2 = inlined_call_operand.hbm [shape: f32[2,256], index: 2, kind: output, shape index: {}]
  %s3 = sld [smem:[#allocation0]]
  $region26: #{tpu_custom_call.1} parent=0
    _
  %s5 = ssub.s32 1, %s3
  %s6 = scalar_select 0, %s5, %s3
  $region1: #{tpu_custom_call.1} parent=0
    #allocation2 [shape = 'u8[2048]{0}', space=vmem, size = 0x800, scoped, tag = 'input window, operand 0, single buffered']
    #allocation3 [shape = 's32[1]{0}', space=sflag, size = 0x4, scoped, tag = 'scoped memory for tpu_custom_call.1']
    #allocation4 [shape = 's32[1]{0}', space=sflag, size = 0x4, scoped, tag = 'scoped memory for tpu_custom_call.1']
    #allocation5 [shape = 'u8[1024]{0}', space=vmem, size = 0x400, scoped, tag = 'input window, operand 1, single buffered']
    #allocation6 [shape = 's32[1]{0}', space=sflag, size = 0x4, scoped, tag = 'scoped memory for tpu_custom_call.1']
    #allocation7 [shape = 'u8[2048]{0}', space=vmem, size = 0x800, scoped, tag = 'output window, operand 0, single buffered']
    %7 = vsyncpa [#allocation3], 0
    %8 = vsyncpa [#allocation6], 0
    %9 = vsyncpa [#allocation4], 0
    // Predicated region
    $region2: #{tpu_custom_call.1} parent=1 // pred_check
      _
    $region3: #{tpu_custom_call.1} parent=1 // pred_check_branch
      %11 = sbr.rel (0) target = $region5
    $region4: #{tpu_custom_call.1} parent=1 // pred_region
      %13 = vsyncadd [#allocation3], 0
      %s15 = sshll.u32 %s0, 4
      %s16 = int_to_ptr.hbm [resolvable:$true] %s15
      %s17 = sshll.u32 [#allocation2], 4
      %s18 = int_to_ptr.vmem [resolvable:$true] %s17
      %20 = dma.hbm_to_vmem [thread:$0]  %s16, 64, %s18, [#allocation3]
    $region5: #{tpu_custom_call.1} parent=1 // pred_fallthru
      _
    // Predicated region
    $region6: #{tpu_custom_call.1} parent=1 // pred_check
      _
    $region7: #{tpu_custom_call.1} parent=1 // pred_check_branch
      %22 = sbr.rel (0) target = $region9
    $region8: #{tpu_custom_call.1} parent=1 // pred_region
      %24 = vsyncadd [#allocation6], 0
      %s26 = sshll.u32 %s1, 4
      %s27 = int_to_ptr.hbm [resolvable:$true] %s26
      %s28 = sshll.u32 [#allocation5], 4
      %s29 = int_to_ptr.vmem [resolvable:$true] %s28
      %31 = dma.hbm_to_vmem [thread:$0]  %s27, 32, %s29, [#allocation6]
    $region9: #{tpu_custom_call.1} parent=1 // pred_fallthru
      _
    // Predicated region
    $region10: #{tpu_custom_call.1} parent=1 // pred_check
      _
    $region11: #{tpu_custom_call.1} parent=1 // pred_check_branch
      %33 = sbr.rel (0) target = $region13
    $region12: #{tpu_custom_call.1} parent=1 // pred_region
      %35 = dma.done [#allocation3], 64
    $region13: #{tpu_custom_call.1} parent=1 // pred_fallthru
      _
    // Predicated region
    $region14: #{tpu_custom_call.1} parent=1 // pred_check
      _
    $region15: #{tpu_custom_call.1} parent=1 // pred_check_branch
      %37 = sbr.rel (0) target = $region17
    $region16: #{tpu_custom_call.1} parent=1 // pred_region
      %39 = dma.done [#allocation6], 32
    $region17: #{tpu_custom_call.1} parent=1 // pred_fallthru
      _
    %v40 = vld [vmem:[#allocation2] sm:$0xf]
    %v41 = vld [vmem:[#allocation5] sm:$0x3]
    %v43 = vperm.slane %v41, 0
    %v44 = vperm.slane %v41, 1
    %v45 = vrot.slane %v44, 6
    %vm46 = vcmask 1041408
    %v47 = vsel %vm46, %v43, %v45
    %v49 = vadd.f32 %v40, %v47
    %50 = vst [vmem:[#allocation7] sm:$0xf] %v49
    // Predicated region
    $region18: #{tpu_custom_call.1} parent=1 // pred_check
      _
    $region19: #{tpu_custom_call.1} parent=1 // pred_check_branch
      %52 = sbr.rel (0) target = $region21
    $region20: #{tpu_custom_call.1} parent=1 // pred_region
      %54 = vsyncadd [#allocation4], 0
      %s56 = sshll.u32 [#allocation7], 4
      %s57 = int_to_ptr.vmem [resolvable:$true] %s56
      %s58 = sshll.u32 %s2, 4
      %s59 = int_to_ptr.hbm [resolvable:$true] %s58
      %61 = dma.vmem_to_hbm [thread:$0]  %s57, 64, %s59, [#allocation4]
    $region21: #{tpu_custom_call.1} parent=1 // pred_fallthru
      _
    // Predicated region
    $region22: #{tpu_custom_call.1} parent=1 // pred_check
      _
    $region23: #{tpu_custom_call.1} parent=1 // pred_check_branch
      %63 = sbr.rel (0) target = $region25
    $region24: #{tpu_custom_call.1} parent=1 // pred_region
      %65 = dma.done [#allocation4], 64
    $region25: #{tpu_custom_call.1} parent=1 // pred_fallthru
      _
    %66 = vsyncpa [#allocation3], 1
    %67 = vsyncpa [#allocation6], 1
    %68 = vsyncpa [#allocation4], 1

</llo_original>
